<compile_context>
chip_gen: v7x
topology: tpu7x:2x2x1
jax: 0.10.0
libtpu: 0.0.40
codegen_flags: <defaults>
</compile_context>

<pallas_src>
import functools

import jax
import jax.numpy as jnp
from jax.experimental import pallas as pl
from jax.experimental.pallas import tpu as pltpu

_LANE = 128
_MAX_BATCH_TILE = 1024   # rows per grid step; a few MiB of VMEM, far under limits
_SMALL_BATCH = 256       # below this, run the whole batch as a single block


def _round_up(a, b):
    return (a + b - 1) // b * b


# ----------------------------------------------------------------------------
# Fold the synthetic dag block (conv3x3 same-pad + ReLU + 2x2 avg-pool) and the
# fc head into a chain of dense matrices.  Done once, outside the kernel.
# ----------------------------------------------------------------------------
def _conv3x3_as_matrix(k, h, w):
    """(h*w, h*w) matrix C such that x_flat @ C == same-padded 3x3 correlation."""
    pi = jnp.arange(h)
    pj = jnp.arange(w)
    di = pi[:, None] - pi[None, :] + 1            # (h, h): di[p, i] = p - i + 1
    dj = pj[:, None] - pj[None, :] + 1            # (w, w): dj[q, j] = q - j + 1
    vi = (di >= 0) & (di <= 2)
    vj = (dj >= 0) & (dj <= 2)
    kv = k[jnp.clip(di, 0, 2)[:, None, :, None],
           jnp.clip(dj, 0, 2)[None, :, None, :]]  # (h, w, h, w)
    mask = vi[:, None, :, None] & vj[None, :, None, :]
    return jnp.where(mask, kv, 0.0).reshape(h * w, h * w).astype(jnp.float32)


def _avgpool2x2_as_matrix(h, w):
    """(h*w, (h//2)*(w//2)) matrix P such that y_flat @ P == 2x2 average pool."""
    mi = (jnp.arange(h)[:, None] // 2 == jnp.arange(h // 2)[None, :])
    mj = (jnp.arange(w)[:, None] // 2 == jnp.arange(w // 2)[None, :])
    P = (mi[:, None, :, None] & mj[None, :, None, :]).astype(jnp.float32) * 0.25
    return P.reshape(h * w, (h // 2) * (w // 2))


def _pad2d(a, rows, cols):
    return jnp.pad(a, ((0, rows - a.shape[0]), (0, cols - a.shape[1])))


def prepare_fused_params(params, input_hw, num_blocks=2):
    """Precompute the matmul-chain form of the whole forward pass.

    Per block:  d <- avgpool2x2(relu(conv3x3(d) + b))
    Folded:     e <- relu(e @ A_i + b_i)   with A_0 = C_0, A_i = P_{i-1} @ C_i
    Head:       z  = e @ A_head + fc_b     with A_head = P_{last} @ W_fc
    All matrices are zero-padded so every lane dimension (and A_0's row count)
    is a multiple of 128, then cast to bf16 for the MXU.  Zero-padded lanes
    pass through ReLU into zero rows of the next padded matrix, so they never
    contribute to the result; the head's padded columns/bias are zero.
    """
    H, W = input_hw
    sizes = [(H // 2 ** i, W // 2 ** i) for i in range(num_blocks + 1)]

    raw = []
    for i in range(num_blocks):
        hi, wi = sizes[i]
        C = _conv3x3_as_matrix(params[f"conv_w_{i}"].astype(jnp.float32), hi, wi)
        if i == 0:
            raw.append(C)
        else:
            hp, wp = sizes[i - 1]
            raw.append(_avgpool2x2_as_matrix(hp, wp) @ C)
    hl, wl = sizes[num_blocks - 1]
    raw.append(_avgpool2x2_as_matrix(hl, wl) @ params["fc_w_t"].astype(jnp.float32))

    mats = []
    prev_cols = _round_up(raw[0].shape[0], _LANE)   # lane-aligned flattened input
    for A in raw:
        rows = prev_cols
        cols = _round_up(A.shape[1], _LANE)
        mats.append(_pad2d(A, rows, cols).astype(jnp.bfloat16))
        prev_cols = cols

    biases = jnp.asarray(
        [params[f"conv_b_{i}"][0] for i in range(num_blocks)], dtype=jnp.float32)
    fc_b = _pad2d(params["fc_b"].astype(jnp.float32).reshape(1, -1), 1, prev_cols)

    return {"mats": tuple(mats), "biases": biases, "fc_b": fc_b}


# ----------------------------------------------------------------------------
# Fused kernel: (batch-tile) x [matmul + bias + ReLU]*num_blocks -> head matmul
# ----------------------------------------------------------------------------
def _make_fused_kernel(num_blocks):
    n_mats = num_blocks + 1

    def kernel(*refs):
        x_ref = refs[0]
        mat_refs = refs[1:1 + n_mats]
        fcb_ref = refs[1 + n_mats]
        bias_ref = refs[2 + n_mats]               # SMEM, (num_blocks,) f32
        o_ref = refs[3 + n_mats]

        d = x_ref[...]                            # (tile_n, feat0) bf16 in VMEM
        for i in range(num_blocks):
            acc = jnp.dot(d, mat_refs[i][...], preferred_element_type=jnp.float32)
            d = jnp.maximum(acc + bias_ref[i], 0.0).astype(jnp.bfloat16)
        z = jnp.dot(d, mat_refs[num_blocks][...], preferred_element_type=jnp.float32)
        o_ref[...] = (z + fcb_ref[...]).astype(o_ref.dtype)

    return kernel


# ----------------------------------------------------------------------------
# Full forward (mirrors MNISTBlockModuleDagWrapper.forward)
# ----------------------------------------------------------------------------
def mnist_block_dag_forward(x_nchw, fused, *, output_size, num_blocks=2):
    n, _, h, w = x_nchw.shape
    mats, biases, fc_b = fused["mats"], fused["biases"], fused["fc_b"]
    feat0 = mats[0].shape[0]                      # H*W rounded up to 128 lanes
    out_pad = fc_b.shape[1]

    # squeeze channel (C == 1) + flatten spatial + bf16 cast -> (N, feat0)
    x_flat = x_nchw[:, 0, :, :].reshape(n, h * w).astype(jnp.bfloat16)
    if feat0 != h * w:
        # Lane-align the flattened feature dim once (A_0 has matching zero rows).
        x_flat = jnp.pad(x_flat, ((0, 0), (0, feat0 - h * w)))

    if n <= _SMALL_BATCH:
        tile_n = n                                # single full-array block
    else:
        # >= 2 grid steps so v7x's two TensorCores both get work; 8-row aligned.
        tile_n = min(_MAX_BATCH_TILE, _round_up(pl.cdiv(n, 2), 8))
    grid = (pl.cdiv(n, tile_n),)                  # last block may be partial;
                                                  # rows are independent, extras discarded

    in_specs = [pl.BlockSpec((tile_n, feat0), lambda i: (i, 0))]
    in_specs += [pl.BlockSpec(m.shape, lambda i: (0, 0)) for m in mats]
    in_specs.append(pl.BlockSpec(fc_b.shape, lambda i: (0, 0)))
    in_specs.append(pl.BlockSpec(memory_space=pltpu.MemorySpace.SMEM))

    flops = 2 * n * sum(m.shape[0] * m.shape[1] for m in mats)
    bytes_accessed = (x_flat.size * 2 + n * out_pad * 2
                      + sum(m.size for m in mats) * 2 + fc_b.size * 4)

    z_pad = pl.pallas_call(
        _make_fused_kernel(num_blocks),
        out_shape=jax.ShapeDtypeStruct((n, out_pad), jnp.bfloat16),
        grid=grid,
        in_specs=in_specs,
        out_specs=pl.BlockSpec((tile_n, out_pad), lambda i: (i, 0)),
        compiler_params=pltpu.CompilerParams(dimension_semantics=("parallel",)),
        cost_estimate=pl.CostEstimate(flops=flops, transcendentals=0,
                                      bytes_accessed=bytes_accessed),
    )(x_flat, *mats, fc_b, biases)

    return z_pad[:n, :output_size].astype(jnp.float32)


def _reference_forward(x_nchw, params, num_blocks=2):
    """Pure-JAX f32 reference (explicit conv/ReLU/pool/linear) to check the kernel."""
    d = x_nchw[:, 0, :, :].astype(jnp.float32)
    for i in range(num_blocks):
        n, h, w = d.shape
        xpad = jnp.pad(d, ((0, 0), (1, 1), (1, 1)))
        acc = jnp.zeros((n, h, w), jnp.float32)
        cw = params[f"conv_w_{i}"]
        for di in range(3):
            for dj in range(3):
                acc = acc + cw[di, dj] * xpad[:, di:di + h, dj:dj + w]
        y = jnp.maximum(acc + params[f"conv_b_{i}"][0], 0.0)
        d = y.reshape(n, h // 2, 2, w // 2, 2).mean(axis=(2, 4))
    flat = d.reshape(d.shape[0], -1)
    return flat @ params["fc_w_t"] + params["fc_b"]


if __name__ == "__main__":
    # Small MNIST-like config: input_size = (N, C, H, W) = (2, 1, 16, 16),
    # output_size = 10, num_blocks = 2 -> final_outsize = (16/4)*(16/4) = 16.
    N, C, H, W = 2, 1, 16, 16
    OUTPUT_SIZE = 10
    NUM_BLOCKS = 2
    final_outsize = (H // 2 ** NUM_BLOCKS) * (W // 2 ** NUM_BLOCKS)

    key = jax.random.PRNGKey(0)
    kx, *kp = jax.random.split(key, 2 + 3 * NUM_BLOCKS)

    x = jax.random.normal(kx, (N, C, H, W), dtype=jnp.float32)

    params = {}
    for i in range(NUM_BLOCKS):
        params[f"conv_w_{i}"] = 0.3 * jax.random.normal(kp[2 * i], (3, 3), dtype=jnp.float32)
        params[f"conv_b_{i}"] = jnp.array([0.05 * (i + 1)], dtype=jnp.float32)
    params["fc_w_t"] = 0.2 * jax.random.normal(kp[-1], (final_outsize, OUTPUT_SIZE),
                                               dtype=jnp.float32)
    params["fc_b"] = 0.01 * jnp.ones((1, OUTPUT_SIZE), dtype=jnp.float32)

    fused = prepare_fused_params(params, (H, W), num_blocks=NUM_BLOCKS)

    fwd = jax.jit(functools.partial(mnist_block_dag_forward,
                                    output_size=OUTPUT_SIZE, num_blocks=NUM_BLOCKS))
    z = fwd(x, fused)
    jax.block_until_ready(z)

    z_ref = _reference_forward(x, params, num_blocks=NUM_BLOCKS)
    assert z.shape == (N, OUTPUT_SIZE), z.shape
    # bf16 weights/activations vs f32 reference: slightly relaxed tolerance.
    assert jnp.allclose(z, z_ref, atol=2e-2, rtol=2e-2), "kernel/reference mismatch"

    print("KERNEL_OK")
</pallas_src>

<mosaic_0001>
module attributes {stable_mosaic.version = 11 : i64} {
  func.func @kernel(%arg0: i32, %arg1: memref<2x256xbf16, #tpu.memory_space<vmem>>, %arg2: memref<256x256xbf16, #tpu.memory_space<vmem>>, %arg3: memref<256x128xbf16, #tpu.memory_space<vmem>>, %arg4: memref<128x128xbf16, #tpu.memory_space<vmem>>, %arg5: memref<1x128xf32, #tpu.memory_space<vmem>>, %arg6: memref<2xf32, #tpu.memory_space<smem>>, %arg7: memref<2x128xbf16, #tpu.memory_space<vmem>>) attributes {dimension_semantics = [#tpu.dimension_semantics<parallel>], iteration_bounds = array<i64: 1>, scalar_prefetch = 0 : i64, scratch_operands = 0 : i64, tpu.core_type = #tpu.core_type<tc>, window_params = [{transform_indices = @transform_0, window_bounds = array<i64: 2, 256>}, {pipeline_mode = #tpu.pipeline_mode<synchronous>, transform_indices = @transform_1, window_bounds = array<i64: 256, 256>}, {pipeline_mode = #tpu.pipeline_mode<synchronous>, transform_indices = @transform_2, window_bounds = array<i64: 256, 128>}, {pipeline_mode = #tpu.pipeline_mode<synchronous>, transform_indices = @transform_3, window_bounds = array<i64: 128, 128>}, {pipeline_mode = #tpu.pipeline_mode<synchronous>, transform_indices = @transform_4, window_bounds = array<i64: 1, 128>}, {transform_indices = @transform_5, window_bounds = array<i64: 2>}, {transform_indices = @transform_6, window_bounds = array<i64: 2, 128>}]} {
    %c0 = arith.constant 0 : index
    %c0_0 = arith.constant 0 : index
    %0 = vector.load %arg1[%c0, %c0_0] : memref<2x256xbf16, #tpu.memory_space<vmem>>, vector<2x256xbf16>
    %c0_1 = arith.constant 0 : index
    %c0_2 = arith.constant 0 : index
    %1 = vector.load %arg2[%c0_1, %c0_2] : memref<256x256xbf16, #tpu.memory_space<vmem>>, vector<256x256xbf16>
    %cst = arith.constant dense<0.000000e+00> : vector<2x256xf32>
    %2 = tpu.matmul %0, %1, %cst {dimension_numbers = #tpu.dot_dimension_numbers<[1], [0], [0], [1], [0, 0, 1, 1], [], []>} : vector<2x256xbf16>, vector<256x256xbf16>, vector<2x256xf32> -> vector<2x256xf32>
    %c0_3 = arith.constant 0 : index
    %3 = memref.load %arg6[%c0_3] : memref<2xf32, #tpu.memory_space<smem>>
    %4 = vector.broadcast %3 : f32 to vector<2x256xf32>
    %5 = arith.addf %2, %4 : vector<2x256xf32>
    %cst_4 = arith.constant 0.000000e+00 : f32
    %6 = vector.broadcast %cst_4 : f32 to vector<2x256xf32>
    %7 = arith.maximumf %5, %6 : vector<2x256xf32>
    %8 = arith.truncf %7 : vector<2x256xf32> to vector<2x256xbf16>
    %c0_5 = arith.constant 0 : index
    %c0_6 = arith.constant 0 : index
    %9 = vector.load %arg3[%c0_5, %c0_6] : memref<256x128xbf16, #tpu.memory_space<vmem>>, vector<256x128xbf16>
    %cst_7 = arith.constant dense<0.000000e+00> : vector<2x128xf32>
    %10 = tpu.matmul %8, %9, %cst_7 {dimension_numbers = #tpu.dot_dimension_numbers<[1], [0], [0], [1], [0, 0, 1, 1], [], []>} : vector<2x256xbf16>, vector<256x128xbf16>, vector<2x128xf32> -> vector<2x128xf32>
    %c1 = arith.constant 1 : index
    %11 = memref.load %arg6[%c1] : memref<2xf32, #tpu.memory_space<smem>>
    %12 = vector.broadcast %11 : f32 to vector<2x128xf32>
    %13 = arith.addf %10, %12 : vector<2x128xf32>
    %cst_8 = arith.constant 0.000000e+00 : f32
    %14 = vector.broadcast %cst_8 : f32 to vector<2x128xf32>
    %15 = arith.maximumf %13, %14 : vector<2x128xf32>
    %16 = arith.truncf %15 : vector<2x128xf32> to vector<2x128xbf16>
    %c0_9 = arith.constant 0 : index
    %c0_10 = arith.constant 0 : index
    %17 = vector.load %arg4[%c0_9, %c0_10] : memref<128x128xbf16, #tpu.memory_space<vmem>>, vector<128x128xbf16>
    %cst_11 = arith.constant dense<0.000000e+00> : vector<2x128xf32>
    %18 = tpu.matmul %16, %17, %cst_11 {dimension_numbers = #tpu.dot_dimension_numbers<[1], [0], [0], [1], [0, 0, 1, 1], [], []>} : vector<2x128xbf16>, vector<128x128xbf16>, vector<2x128xf32> -> vector<2x128xf32>
    %c0_12 = arith.constant 0 : index
    %c0_13 = arith.constant 0 : index
    %19 = vector.load %arg5[%c0_12, %c0_13] : memref<1x128xf32, #tpu.memory_space<vmem>>, vector<1x128xf32>
    %20 = vector.broadcast %19 : vector<1x128xf32> to vector<2x128xf32>
    %21 = arith.addf %18, %20 : vector<2x128xf32>
    %22 = arith.truncf %21 : vector<2x128xf32> to vector<2x128xbf16>
    %c0_14 = arith.constant 0 : index
    %c0_15 = arith.constant 0 : index
    %23 = vector.load %arg7[%c0_14, %c0_15] : memref<2x128xbf16, #tpu.memory_space<vmem>>, vector<2x128xbf16>
    tpu.vector_store %arg7[%c0_14, %c0_15], %22 {strides = array<i32>} : memref<2x128xbf16, #tpu.memory_space<vmem>>, vector<2x128xbf16>,
    return
  }
  func.func @transform_0(%arg0: i32) -> (i32, i32) {
    %c0_i32 = arith.constant 0 : i32
    %c0_i32_0 = arith.constant 0 : i32
    return %arg0, %c0_i32 : i32, i32
  }
  func.func @transform_1(%arg0: i32) -> (i32, i32) {
    %c0_i32 = arith.constant 0 : i32
    %c0_i32_0 = arith.constant 0 : i32
    %c0_i32_1 = arith.constant 0 : i32
    return %c0_i32, %c0_i32_0 : i32, i32
  }
  func.func @transform_2(%arg0: i32) -> (i32, i32) {
    %c0_i32 = arith.constant 0 : i32
    %c0_i32_0 = arith.constant 0 : i32
    %c0_i32_1 = arith.constant 0 : i32
    return %c0_i32, %c0_i32_0 : i32, i32
  }
  func.func @transform_3(%arg0: i32) -> (i32, i32) {
    %c0_i32 = arith.constant 0 : i32
    %c0_i32_0 = arith.constant 0 : i32
    %c0_i32_1 = arith.constant 0 : i32
    return %c0_i32, %c0_i32_0 : i32, i32
  }
  func.func @transform_4(%arg0: i32) -> (i32, i32) {
    %c0_i32 = arith.constant 0 : i32
    %c0_i32_0 = arith.constant 0 : i32
    %c0_i32_1 = arith.constant 0 : i32
    return %c0_i32, %c0_i32_0 : i32, i32
  }
  func.func @transform_5(%arg0: i32) -> i32 {
    %c0_i32 = arith.constant 0 : i32
    %c0_i32_0 = arith.constant 0 : i32
    return %c0_i32 : i32
  }
  func.func @transform_6(%arg0: i32) -> (i32, i32) {
    %c0_i32 = arith.constant 0 : i32
    %c0_i32_0 = arith.constant 0 : i32
    return %arg0, %c0_i32 : i32, i32
  }
}

</mosaic_0001>

<llo_original>
// kernel: mnist_block_dag_forward.1
$region0: #{mnist_block_dag_forward.1}
  #allocation0 [shape = 'u32[]', space=smem, size = 0x4, offset = 0x4, fixed_abs, tag = 'smem constant byte address 0x4 - core index']
  #allocation1 [shape = 'u32[144,128]{1,0:T(1,128)}', space=vmem, size = 0x12000, scoped, tag = 'internal scratch']
  %s0 = inlined_call_operand.vmem [shape: bf16[2,256], index: 0, kind: input, shape index: {}]
  %s1 = inlined_call_operand.hbm [shape: bf16[256,256], index: 1, kind: input, shape index: {}]
  %s2 = inlined_call_operand.hbm [shape: bf16[256,128], index: 2, kind: input, shape index: {}]
  %s3 = inlined_call_operand.vmem [shape: bf16[128,128], index: 3, kind: input, shape index: {}]
  %s4 = inlined_call_operand.vmem [shape: f32[1,128], index: 4, kind: input, shape index: {}]
  %s5 = inlined_call_operand.vmem [shape: f32[2], index: 5, kind: input, shape index: {}]
  %s6 = inlined_call_operand.vmem [shape: bf16[2,128], index: 6, kind: output, shape index: {}]
  %s7 = sld [smem:[#allocation0]]
  $region46: #{mnist_block_dag_forward.1} parent=0
    _
  %s9 = ssub.s32 1, %s7
  %s10 = scalar_select 0, %s9, %s7
  $region1: #{mnist_block_dag_forward.1} parent=0
    #allocation2 [shape = 'u8[131072]{0}', space=vmem, size = 0x20000, scoped, tag = 'input window, operand 1, single buffered']
    #allocation3 [shape = 's32[1]{0}', space=sflag, size = 0x4, scoped, tag = 'scoped memory for mnist_block_dag_forward.1']
    #allocation4 [shape = 's32[1]{0}', space=sflag, size = 0x4, scoped, tag = 'scoped memory for mnist_block_dag_forward.1']
    #allocation5 [shape = 'u8[65536]{0}', space=vmem, size = 0x10000, scoped, tag = 'input window, operand 2, single buffered']
    #allocation6 [shape = 's32[1]{0}', space=sflag, size = 0x4, scoped, tag = 'scoped memory for mnist_block_dag_forward.1']
    #allocation7 [shape = 'u8[512]{0}', space=smem, size = 0x200, scoped, tag = 'input window, operand 5, single buffered']
    %11 = vsyncpa [#allocation3], 0
    %12 = vsyncpa [#allocation6], 0
    %13 = vsyncpa [#allocation4], 0
    // Predicated region
    $region2: #{mnist_block_dag_forward.1} parent=1 // pred_check
      _
    $region3: #{mnist_block_dag_forward.1} parent=1 // pred_check_branch
      %15 = sbr.rel (0) target = $region5
    $region4: #{mnist_block_dag_forward.1} parent=1 // pred_region
      _
    $region5: #{mnist_block_dag_forward.1} parent=1 // pred_fallthru
      _
    // Predicated region
    $region6: #{mnist_block_dag_forward.1} parent=1 // pred_check
      _
    $region7: #{mnist_block_dag_forward.1} parent=1 // pred_check_branch
      %17 = sbr.rel (0) target = $region9
    $region8: #{mnist_block_dag_forward.1} parent=1 // pred_region
      %s19 = ssub.s32 4096, 4096
      %20 = vsyncadd [#allocation3], %s19
      %s21 = sshll.u32 [#allocation2], 4
      %s22 = int_to_ptr.vmem [resolvable:$true] %s21
      %27 = dma.hbm_to_vmem [thread:$0]  %s1, 4096, %s22, [#allocation3], 128, 128, 8
    $region9: #{mnist_block_dag_forward.1} parent=1 // pred_fallthru
      _
    // Predicated region
    $region10: #{mnist_block_dag_forward.1} parent=1 // pred_check
      _
    $region11: #{mnist_block_dag_forward.1} parent=1 // pred_check_branch
      %29 = sbr.rel (0) target = $region13
    $region12: #{mnist_block_dag_forward.1} parent=1 // pred_region
      %s31 = ssub.s32 2048, 2048
      %32 = vsyncadd [#allocation6], %s31
      %s33 = sshll.u32 [#allocation5], 4
      %s34 = int_to_ptr.vmem [resolvable:$true] %s33
      %39 = dma.hbm_to_vmem [thread:$0]  %s2, 2048, %s34, [#allocation6], 64, 64, 4
    $region13: #{mnist_block_dag_forward.1} parent=1 // pred_fallthru
      _
    // Predicated region
    $region14: #{mnist_block_dag_forward.1} parent=1 // pred_check
      _
    $region15: #{mnist_block_dag_forward.1} parent=1 // pred_check_branch
      %41 = sbr.rel (0) target = $region17
    $region16: #{mnist_block_dag_forward.1} parent=1 // pred_region
      _
    $region17: #{mnist_block_dag_forward.1} parent=1 // pred_fallthru
      _
    // Predicated region
    $region18: #{mnist_block_dag_forward.1} parent=1 // pred_check
      _
    $region19: #{mnist_block_dag_forward.1} parent=1 // pred_check_branch
      %43 = sbr.rel (0) target = $region21
    $region20: #{mnist_block_dag_forward.1} parent=1 // pred_region
      _
    $region21: #{mnist_block_dag_forward.1} parent=1 // pred_fallthru
      _
    // Predicated region
    $region22: #{mnist_block_dag_forward.1} parent=1 // pred_check
      _
    $region23: #{mnist_block_dag_forward.1} parent=1 // pred_check_branch
      %45 = sbr.rel (0) target = $region25
    $region24: #{mnist_block_dag_forward.1} parent=1 // pred_region
      %s47 = ssub.s32 16, 16
      %48 = vsyncadd [#allocation4], %s47
      %s50 = sshll.u32 %s5, 4
      %s51 = int_to_ptr.vmem [resolvable:$true] %s50
      %53 = dma.vmem_to_smem %s51, 16, [#allocation7], [#allocation4]
    $region25: #{mnist_block_dag_forward.1} parent=1 // pred_fallthru
      _
    // Predicated region
    $region26: #{mnist_block_dag_forward.1} parent=1 // pred_check
      _
    $region27: #{mnist_block_dag_forward.1} parent=1 // pred_check_branch
      %55 = sbr.rel (0) target = $region29
    $region28: #{mnist_block_dag_forward.1} parent=1 // pred_region
      %56 = dma.done [#allocation3], 4096
    $region29: #{mnist_block_dag_forward.1} parent=1 // pred_fallthru
      _
    // Predicated region
    $region30: #{mnist_block_dag_forward.1} parent=1 // pred_check
      _
    $region31: #{mnist_block_dag_forward.1} parent=1 // pred_check_branch
      %58 = sbr.rel (0) target = $region33
    $region32: #{mnist_block_dag_forward.1} parent=1 // pred_region
      %59 = dma.done [#allocation6], 2048
    $region33: #{mnist_block_dag_forward.1} parent=1 // pred_fallthru
      _
    // Predicated region
    $region34: #{mnist_block_dag_forward.1} parent=1 // pred_check
      _
    $region35: #{mnist_block_dag_forward.1} parent=1 // pred_check_branch
      %61 = sbr.rel (0) target = $region37
    $region36: #{mnist_block_dag_forward.1} parent=1 // pred_region
      %62 = dma.done [#allocation4], 16
    $region37: #{mnist_block_dag_forward.1} parent=1 // pred_fallthru
      _
    %63 = sfence
    %v65 = vld [vmem:[%s0] sm:$0x3]
    %v66 = vld [vmem:[#allocation2] sm:$0xff]
    %v67 = vld [vmem:[#allocation2 + $0x8] sm:$0xff]
    %v68 = vld [vmem:[#allocation2 + $0x10] sm:$0xff]
    %v69 = vld [vmem:[#allocation2 + $0x18] sm:$0xff]
    %v70 = vld [vmem:[#allocation2 + $0x20] sm:$0xff]
    %v71 = vld [vmem:[#allocation2 + $0x28] sm:$0xff]
    %v72 = vld [vmem:[#allocation2 + $0x30] sm:$0xff]
    %v73 = vld [vmem:[#allocation2 + $0x38] sm:$0xff]
    %v74 = vld [vmem:[#allocation2 + $0x40] sm:$0xff]
    %v75 = vld [vmem:[#allocation2 + $0x48] sm:$0xff]
    %v76 = vld [vmem:[#allocation2 + $0x50] sm:$0xff]
    %v77 = vld [vmem:[#allocation2 + $0x58] sm:$0xff]
    %v78 = vld [vmem:[#allocation2 + $0x60] sm:$0xff]
    %v79 = vld [vmem:[#allocation2 + $0x68] sm:$0xff]
    %v80 = vld [vmem:[#allocation2 + $0x70] sm:$0xff]
    %v81 = vld [vmem:[#allocation2 + $0x78] sm:$0xff]
    %v82 = vld [vmem:[#allocation2 + $0x80] sm:$0xff]
    %v83 = vld [vmem:[#allocation2 + $0x88] sm:$0xff]
    %v84 = vld [vmem:[#allocation2 + $0x90] sm:$0xff]
    %v85 = vld [vmem:[#allocation2 + $0x98] sm:$0xff]
    %v86 = vld [vmem:[#allocation2 + $0xa0] sm:$0xff]
    %v87 = vld [vmem:[#allocation2 + $0xa8] sm:$0xff]
    %v88 = vld [vmem:[#allocation2 + $0xb0] sm:$0xff]
    %v89 = vld [vmem:[#allocation2 + $0xb8] sm:$0xff]
    %v90 = vld [vmem:[#allocation2 + $0xc0] sm:$0xff]
    %v91 = vld [vmem:[#allocation2 + $0xc8] sm:$0xff]
    %v92 = vld [vmem:[#allocation2 + $0xd0] sm:$0xff]
    %v93 = vld [vmem:[#allocation2 + $0xd8] sm:$0xff]
    %v94 = vld [vmem:[#allocation2 + $0xe0] sm:$0xff]
    %v95 = vld [vmem:[#allocation2 + $0xe8] sm:$0xff]
    %v96 = vld [vmem:[#allocation2 + $0xf0] sm:$0xff]
    %v97 = vld [vmem:[#allocation2 + $0xf8] sm:$0xff]
    %s98 = sld [smem:[#allocation7]]
    %v99 = vstv %s98
    %v102 = vunpack.c.l.s4 1966171168
    %v103 = vunpack.c.0.s8 %v102
    %v104 = vlaneseq
    %v105 = vshrl.u32 %v104, 7
    %v106 = vsub.s32 %v103, %v105
    %v107 = vrot.slane %v65, %v106
    %v108 = vcombine.high %v107, %v107
    %v110 = vunpack.c.l.s4 1966171168
    %v111 = vunpack.c.0.s8 %v110
    %v112 = vlaneseq
    %v113 = vshrl.u32 %v112, 7
    %v114 = vsub.s32 %v111, %v113
    %v115 = vrot.slane %v107, %v114
    %v117 = vunpack.c.l.s4 1966171168
    %v118 = vunpack.c.0.s8 %v117
    %v119 = vlaneseq
    %v120 = vshrl.u32 %v119, 7
    %v121 = vsub.s32 %v118, %v120
    %v122 = vrot.slane %v108, %v121
    %v157 = vunpack.c.l.b16 %v66
    %v158 = vunpack.c.h.b16 %v66
    %v159 = vunpack.c.l.b16 %v67
    %v160 = vunpack.c.h.b16 %v67
    %v161 = vunpack.c.l.b16 %v68
    %v162 = vunpack.c.h.b16 %v68
    %v163 = vunpack.c.l.b16 %v69
    %v164 = vunpack.c.h.b16 %v69
    %v165 = vunpack.c.l.b16 %v70
    %v166 = vunpack.c.h.b16 %v70
    %v167 = vunpack.c.l.b16 %v71
    %v168 = vunpack.c.h.b16 %v71
    %v169 = vunpack.c.l.b16 %v72
    %v170 = vunpack.c.h.b16 %v72
    %v171 = vunpack.c.l.b16 %v73
    %v172 = vunpack.c.h.b16 %v73
    %v173 = vunpack.c.l.b16 %v74
    %v174 = vunpack.c.h.b16 %v74
    %v175 = vunpack.c.l.b16 %v75
    %v176 = vunpack.c.h.b16 %v75
    %v177 = vunpack.c.l.b16 %v76
    %v178 = vunpack.c.h.b16 %v76
    %v179 = vunpack.c.l.b16 %v77
    %v180 = vunpack.c.h.b16 %v77
    %v181 = vunpack.c.l.b16 %v78
    %v182 = vunpack.c.h.b16 %v78
    %v183 = vunpack.c.l.b16 %v79
    %v184 = vunpack.c.h.b16 %v79
    %v185 = vunpack.c.l.b16 %v80
    %v186 = vunpack.c.h.b16 %v80
    %v187 = vunpack.c.l.b16 %v81
    %v188 = vunpack.c.h.b16 %v81
    %v189 = vunpack.c.l.b16 %v82
    %v190 = vunpack.c.h.b16 %v82
    %v191 = vunpack.c.l.b16 %v83
    %v192 = vunpack.c.h.b16 %v83
    %v193 = vunpack.c.l.b16 %v84
    %v194 = vunpack.c.h.b16 %v84
    %v195 = vunpack.c.l.b16 %v85
    %v196 = vunpack.c.h.b16 %v85
    %v197 = vunpack.c.l.b16 %v86
    %v198 = vunpack.c.h.b16 %v86
    %v199 = vunpack.c.l.b16 %v87
    %v200 = vunpack.c.h.b16 %v87
    %v201 = vunpack.c.l.b16 %v88
    %v202 = vunpack.c.h.b16 %v88
    %v203 = vunpack.c.l.b16 %v89
    %v204 = vunpack.c.h.b16 %v89
    %v205 = vunpack.c.l.b16 %v90
    %v206 = vunpack.c.h.b16 %v90
    %v207 = vunpack.c.l.b16 %v91
    %v208 = vunpack.c.h.b16 %v91
    %v209 = vunpack.c.l.b16 %v92
    %v210 = vunpack.c.h.b16 %v92
    %v211 = vunpack.c.l.b16 %v93
    %v212 = vunpack.c.h.b16 %v93
    %v213 = vunpack.c.l.b16 %v94
    %v214 = vunpack.c.h.b16 %v94
    %v215 = vunpack.c.l.b16 %v95
    %v216 = vunpack.c.h.b16 %v95
    %v217 = vunpack.c.l.b16 %v96
    %v218 = vunpack.c.h.b16 %v96
    %v219 = vunpack.c.l.b16 %v97
    %v220 = vunpack.c.h.b16 %v97
    %v221 = vpack.c.b16 %v159, %v157
    %v222 = vpack.c.b16 %v160, %v158
    %v223 = vpack.c.b16 %v163, %v161
    %v224 = vpack.c.b16 %v164, %v162
    %v225 = vpack.c.b16 %v167, %v165
    %v226 = vpack.c.b16 %v168, %v166
    %v227 = vpack.c.b16 %v171, %v169
    %v228 = vpack.c.b16 %v172, %v170
    %v229 = vpack.c.b16 %v175, %v173
    %v230 = vpack.c.b16 %v176, %v174
    %v231 = vpack.c.b16 %v179, %v177
    %v232 = vpack.c.b16 %v180, %v178
    %v233 = vpack.c.b16 %v183, %v181
    %v234 = vpack.c.b16 %v184, %v182
    %v235 = vpack.c.b16 %v187, %v185
    %v236 = vpack.c.b16 %v188, %v186
    %v237 = vpack.c.b16 %v191, %v189
    %v238 = vpack.c.b16 %v192, %v190
    %v239 = vpack.c.b16 %v195, %v193
    %v240 = vpack.c.b16 %v196, %v194
    %v241 = vpack.c.b16 %v199, %v197
    %v242 = vpack.c.b16 %v200, %v198
    %v243 = vpack.c.b16 %v203, %v201
    %v244 = vpack.c.b16 %v204, %v202
    %v245 = vpack.c.b16 %v207, %v205
    %v246 = vpack.c.b16 %v208, %v206
    %v247 = vpack.c.b16 %v211, %v209
    %v248 = vpack.c.b16 %v212, %v210
    %v249 = vpack.c.b16 %v215, %v213
    %v250 = vpack.c.b16 %v216, %v214
    %v251 = vpack.c.b16 %v219, %v217
    %v252 = vpack.c.b16 %v220, %v218
    %285 = vmatprep.subr.bf16.mxu0 %v222
    %286 = vmatpush1.bf16.msra.mxu0 %v221
    %287 = vmatprep.subr.bf16.mxu0 %v224
    %288 = vmatpush1.bf16.msra.mxu0 %v223
    %289 = vmatprep.subr.bf16.mxu0 %v226
    %290 = vmatpush1.bf16.msra.mxu0 %v225
    %291 = vmatprep.subr.bf16.mxu0 %v228
    %292 = vmatpush1.bf16.msra.mxu0 %v227
    %293 = vmatprep.subr.bf16.mxu0 %v230
    %294 = vmatpush1.bf16.msra.mxu0 %v229
    %295 = vmatprep.subr.bf16.mxu0 %v232
    %296 = vmatpush1.bf16.msra.mxu0 %v231
    %297 = vmatprep.subr.bf16.mxu0 %v234
    %298 = vmatpush1.bf16.msra.mxu0 %v233
    %299 = vmatprep.subr.bf16.mxu0 %v236
    %300 = vmatpush1.bf16.msra.mxu0 %v235
    %301 = vmatprep.subr.bf16.mxu0 %v238
    %302 = vmatpush1.bf16.msra.mxu0 %v237
    %303 = vmatprep.subr.bf16.mxu0 %v240
    %304 = vmatpush1.bf16.msra.mxu0 %v239
    %305 = vmatprep.subr.bf16.mxu0 %v242
    %306 = vmatpush1.bf16.msra.mxu0 %v241
    %307 = vmatprep.subr.bf16.mxu0 %v244
    %308 = vmatpush1.bf16.msra.mxu0 %v243
    %309 = vmatprep.subr.bf16.mxu0 %v246
    %310 = vmatpush1.bf16.msra.mxu0 %v245
    %311 = vmatprep.subr.bf16.mxu0 %v248
    %312 = vmatpush1.bf16.msra.mxu0 %v247
    %313 = vmatprep.subr.bf16.mxu0 %v250
    %314 = vmatpush1.bf16.msra.mxu0 %v249
    %315 = vmatprep.subr.bf16.mxu0 %v252
    %316 = vmatpush1.bf16.msra.mxu0 %v251
    %317 = vmatprep.mubr.bf16.mxu0 %v122
    %318 = vmatmul.mubr.bf16.gmra.mrb[0].mxu0 %v115
    %v319 = vpop.f32.mrb[0].mxu0
    %v320 = vadd.f32 %v99, %v319
    %v321 = vpop.f32.mrb[0].mxu0
    %v322 = vadd.f32 %v99, %v321
    %v323 = vpop.f32.mrb[0].mxu0
    %v324 = vpop.f32.mrb[0].mxu0
    %325 = vdwg.mxu0
    %v326 = vmax.f32 %v320, 0.0
    %v327 = vmax.f32 %v322, 0.0
    %v328 = vpack.c.bf16 %v326, %v326
    %v329 = vpack.c.bf16 %v327, %v327
    %v330 = vld [vmem:[#allocation5] sm:$0xf]
    %v331 = vld [vmem:[#allocation5 + $0x4] sm:$0xf]
    %v332 = vld [vmem:[#allocation5 + $0x8] sm:$0xf]
    %v333 = vld [vmem:[#allocation5 + $0xc] sm:$0xf]
    %v334 = vld [vmem:[#allocation5 + $0x10] sm:$0xf]
    %v335 = vld [vmem:[#allocation5 + $0x14] sm:$0xf]
    %v336 = vld [vmem:[#allocation5 + $0x18] sm:$0xf]
    %v337 = vld [vmem:[#allocation5 + $0x1c] sm:$0xf]
    %v338 = vld [vmem:[#allocation5 + $0x20] sm:$0xf]
    %v339 = vld [vmem:[#allocation5 + $0x24] sm:$0xf]
    %v340 = vld [vmem:[#allocation5 + $0x28] sm:$0xf]
    %v341 = vld [vmem:[#allocation5 + $0x2c] sm:$0xf]
    %v342 = vld [vmem:[#allocation5 + $0x30] sm:$0xf]
    %v343 = vld [vmem:[#allocation5 + $0x34] sm:$0xf]
    %v344 = vld [vmem:[#allocation5 + $0x38] sm:$0xf]
    %v345 = vld [vmem:[#allocation5 + $0x3c] sm:$0xf]
    %v346 = vld [vmem:[#allocation5 + $0x40] sm:$0xf]
    %v347 = vld [vmem:[#allocation5 + $0x44] sm:$0xf]
    %v348 = vld [vmem:[#allocation5 + $0x48] sm:$0xf]
    %v349 = vld [vmem:[#allocation5 + $0x4c] sm:$0xf]
    %v350 = vld [vmem:[#allocation5 + $0x50] sm:$0xf]
    %v351 = vld [vmem:[#allocation5 + $0x54] sm:$0xf]
    %v352 = vld [vmem:[#allocation5 + $0x58] sm:$0xf]
    %v353 = vld [vmem:[#allocation5 + $0x5c] sm:$0xf]
    %v354 = vld [vmem:[#allocation5 + $0x60] sm:$0xf]
    %v355 = vld [vmem:[#allocation5 + $0x64] sm:$0xf]
    %v356 = vld [vmem:[#allocation5 + $0x68] sm:$0xf]
    %v357 = vld [vmem:[#allocation5 + $0x6c] sm:$0xf]
    %v358 = vld [vmem:[#allocation5 + $0x70] sm:$0xf]
    %v359 = vld [vmem:[#allocation5 + $0x74] sm:$0xf]
    %v360 = vld [vmem:[#allocation5 + $0x78] sm:$0xf]
    %v361 = vld [vmem:[#allocation5 + $0x7c] sm:$0xf]
    %s362 = sld [smem:[#allocation7 + $0x1]]
    %v363 = vstv %s362
    %v396 = vunpack.c.l.b16 %v330
    %v397 = vunpack.c.l.b16 %v331
    %v398 = vunpack.c.l.b16 %v332
    %v399 = vunpack.c.l.b16 %v333
    %v400 = vunpack.c.l.b16 %v334
    %v401 = vunpack.c.l.b16 %v335
    %v402 = vunpack.c.l.b16 %v336
    %v403 = vunpack.c.l.b16 %v337
    %v404 = vunpack.c.l.b16 %v338
    %v405 = vunpack.c.l.b16 %v339
    %v406 = vunpack.c.l.b16 %v340
    %v407 = vunpack.c.l.b16 %v341
    %v408 = vunpack.c.l.b16 %v342
    %v409 = vunpack.c.l.b16 %v343
    %v410 = vunpack.c.l.b16 %v344
    %v411 = vunpack.c.l.b16 %v345
    %v412 = vunpack.c.l.b16 %v346
    %v413 = vunpack.c.l.b16 %v347
    %v414 = vunpack.c.l.b16 %v348
    %v415 = vunpack.c.l.b16 %v349
    %v416 = vunpack.c.l.b16 %v350
    %v417 = vunpack.c.l.b16 %v351
    %v418 = vunpack.c.l.b16 %v352
    %v419 = vunpack.c.l.b16 %v353
    %v420 = vunpack.c.l.b16 %v354
    %v421 = vunpack.c.l.b16 %v355
    %v422 = vunpack.c.l.b16 %v356
    %v423 = vunpack.c.l.b16 %v357
    %v424 = vunpack.c.l.b16 %v358
    %v425 = vunpack.c.l.b16 %v359
    %v426 = vunpack.c.l.b16 %v360
    %v427 = vunpack.c.l.b16 %v361
    %v428 = vpack.c.b16 %v397, %v396
    %v429 = vpack.c.b16 %v399, %v398
    %v430 = vpack.c.b16 %v401, %v400
    %v431 = vpack.c.b16 %v403, %v402
    %v432 = vpack.c.b16 %v405, %v404
    %v433 = vpack.c.b16 %v407, %v406
    %v434 = vpack.c.b16 %v409, %v408
    %v435 = vpack.c.b16 %v411, %v410
    %v436 = vpack.c.b16 %v413, %v412
    %v437 = vpack.c.b16 %v415, %v414
    %v438 = vpack.c.b16 %v417, %v416
    %v439 = vpack.c.b16 %v419, %v418
    %v440 = vpack.c.b16 %v421, %v420
    %v441 = vpack.c.b16 %v423, %v422
    %v442 = vpack.c.b16 %v425, %v424
    %v443 = vpack.c.b16 %v427, %v426
    %460 = vmatprep.subr.bf16.mxu0 0
    %461 = vmatpush1.bf16.msra.mxu0 %v428
    %462 = vmatprep.subr.bf16.mxu0 0
    %463 = vmatpush1.bf16.msra.mxu0 %v429
    %464 = vmatprep.subr.bf16.mxu0 0
    %465 = vmatpush1.bf16.msra.mxu0 %v430
    %466 = vmatprep.subr.bf16.mxu0 0
    %467 = vmatpush1.bf16.msra.mxu0 %v431
    %468 = vmatprep.subr.bf16.mxu0 0
    %469 = vmatpush1.bf16.msra.mxu0 %v432
    %470 = vmatprep.subr.bf16.mxu0 0
    %471 = vmatpush1.bf16.msra.mxu0 %v433
    %472 = vmatprep.subr.bf16.mxu0 0
    %473 = vmatpush1.bf16.msra.mxu0 %v434
    %474 = vmatprep.subr.bf16.mxu0 0
    %475 = vmatpush1.bf16.msra.mxu0 %v435
    %476 = vmatprep.subr.bf16.mxu0 0
    %477 = vmatpush1.bf16.msra.mxu0 %v436
    %478 = vmatprep.subr.bf16.mxu0 0
    %479 = vmatpush1.bf16.msra.mxu0 %v437
    %480 = vmatprep.subr.bf16.mxu0 0
    %481 = vmatpush1.bf16.msra.mxu0 %v438
    %482 = vmatprep.subr.bf16.mxu0 0
    %483 = vmatpush1.bf16.msra.mxu0 %v439
    %484 = vmatprep.subr.bf16.mxu0 0
    %485 = vmatpush1.bf16.msra.mxu0 %v440
    %486 = vmatprep.subr.bf16.mxu0 0
    %487 = vmatpush1.bf16.msra.mxu0 %v441
    %488 = vmatprep.subr.bf16.mxu0 0
    %489 = vmatpush1.bf16.msra.mxu0 %v442
    %490 = vmatprep.subr.bf16.mxu0 0
    %491 = vmatpush1.bf16.msra.mxu0 %v443
    %492 = vmatprep.mubr.bf16.mxu0 %v329
    %493 = vmatmul.mubr.bf16.gmra.mrb[0].mxu0 %v328
    %v494 = vpop.f32.mrb[0].mxu0
    %v495 = vadd.f32 %v363, %v494
    %v496 = vpop.f32.mrb[0].mxu0
    %v497 = vpop.f32.mrb[0].mxu0
    %v498 = vpop.f32.mrb[0].mxu0
    %499 = vdwg.mxu0
    %v500 = vmax.f32 %v495, 0.0
    %v501 = vpack.c.bf16 %v500, %v500
    %v502 = vld [vmem:[%s3] sm:$0xf]
    %v503 = vld [vmem:[%s3 + $0x4] sm:$0xf]
    %v504 = vld [vmem:[%s3 + $0x8] sm:$0xf]
    %v505 = vld [vmem:[%s3 + $0xc] sm:$0xf]
    %v506 = vld [vmem:[%s3 + $0x10] sm:$0xf]
    %v507 = vld [vmem:[%s3 + $0x14] sm:$0xf]
    %v508 = vld [vmem:[%s3 + $0x18] sm:$0xf]
    %v509 = vld [vmem:[%s3 + $0x1c] sm:$0xf]
    %v510 = vld [vmem:[%s3 + $0x20] sm:$0xf]
    %v511 = vld [vmem:[%s3 + $0x24] sm:$0xf]
    %v512 = vld [vmem:[%s3 + $0x28] sm:$0xf]
    %v513 = vld [vmem:[%s3 + $0x2c] sm:$0xf]
    %v514 = vld [vmem:[%s3 + $0x30] sm:$0xf]
    %v515 = vld [vmem:[%s3 + $0x34] sm:$0xf]
    %v516 = vld [vmem:[%s3 + $0x38] sm:$0xf]
    %v517 = vld [vmem:[%s3 + $0x3c] sm:$0xf]
    %v518 = vld [vmem:[%s4] sm:$0x1]
    %v520 = vlaneseq
    %v521 = vshrl.u32 %v520, 7
    %v522 = vsub.s32 0, %v521
    %v523 = vrot.slane %v518, %v522
    %v541 = vunpack.c.l.b16 %v502
    %v542 = vunpack.c.l.b16 %v503
    %v543 = vunpack.c.l.b16 %v504
    %v544 = vunpack.c.l.b16 %v505
    %v545 = vunpack.c.l.b16 %v506
    %v546 = vunpack.c.l.b16 %v507
    %v547 = vunpack.c.l.b16 %v508
    %v548 = vunpack.c.l.b16 %v509
    %v549 = vunpack.c.l.b16 %v510
    %v550 = vunpack.c.l.b16 %v511
    %v551 = vunpack.c.l.b16 %v512
    %v552 = vunpack.c.l.b16 %v513
    %v553 = vunpack.c.l.b16 %v514
    %v554 = vunpack.c.l.b16 %v515
    %v555 = vunpack.c.l.b16 %v516
    %v556 = vunpack.c.l.b16 %v517
    %v557 = vpack.c.b16 %v542, %v541
    %v558 = vpack.c.b16 %v544, %v543
    %v559 = vpack.c.b16 %v546, %v545
    %v560 = vpack.c.b16 %v548, %v547
    %v561 = vpack.c.b16 %v550, %v549
    %v562 = vpack.c.b16 %v552, %v551
    %v563 = vpack.c.b16 %v554, %v553
    %v564 = vpack.c.b16 %v556, %v555
    %573 = vmatprep.subr.bf16.mxu0 0
    %574 = vmatpush1.bf16.msra.mxu0 %v557
    %575 = vmatprep.subr.bf16.mxu0 0
    %576 = vmatpush1.bf16.msra.mxu0 %v558
    %577 = vmatprep.subr.bf16.mxu0 0
    %578 = vmatpush1.bf16.msra.mxu0 %v559
    %579 = vmatprep.subr.bf16.mxu0 0
    %580 = vmatpush1.bf16.msra.mxu0 %v560
    %581 = vmatprep.subr.bf16.mxu0 0
    %582 = vmatpush1.bf16.msra.mxu0 %v561
    %583 = vmatprep.subr.bf16.mxu0 0
    %584 = vmatpush1.bf16.msra.mxu0 %v562
    %585 = vmatprep.subr.bf16.mxu0 0
    %586 = vmatpush1.bf16.msra.mxu0 %v563
    %587 = vmatprep.subr.bf16.mxu0 0
    %588 = vmatpush1.bf16.msra.mxu0 %v564
    %589 = vmatprep.subr.bf16.mxu0 0
    %590 = vmatpush1.bf16.msra.mxu0 0
    %591 = vmatprep.subr.bf16.mxu0 0
    %592 = vmatpush1.bf16.msra.mxu0 0
    %593 = vmatprep.subr.bf16.mxu0 0
    %594 = vmatpush1.bf16.msra.mxu0 0
    %595 = vmatprep.subr.bf16.mxu0 0
    %596 = vmatpush1.bf16.msra.mxu0 0
    %597 = vmatprep.subr.bf16.mxu0 0
    %598 = vmatpush1.bf16.msra.mxu0 0
    %599 = vmatprep.subr.bf16.mxu0 0
    %600 = vmatpush1.bf16.msra.mxu0 0
    %601 = vmatprep.subr.bf16.mxu0 0
    %602 = vmatpush1.bf16.msra.mxu0 0
    %603 = vmatprep.subr.bf16.mxu0 0
    %604 = vmatpush1.bf16.msra.mxu0 0
    %605 = vmatprep.mubr.bf16.mxu0 0
    %606 = vmatmul.mubr.bf16.gmra.mrb[0].mxu0 %v501
    %v607 = vpop.f32.mrb[0].mxu0
    %v608 = vadd.f32 %v523, %v607
    %v609 = vpop.f32.mrb[0].mxu0
    %v610 = vpop.f32.mrb[0].mxu0
    %v611 = vpop.f32.mrb[0].mxu0
    %612 = vdwg.mxu0
    %v613 = vpack.c.bf16 %v608, %v608
    %614 = vst [vmem:[%s6] sm:$0x1] %v613
    // Predicated region
    $region38: #{mnist_block_dag_forward.1} parent=1 // pred_check
      _
    $region39: #{mnist_block_dag_forward.1} parent=1 // pred_check_branch
      %616 = sbr.rel (0) target = $region41
    $region40: #{mnist_block_dag_forward.1} parent=1 // pred_region
      _
    $region41: #{mnist_block_dag_forward.1} parent=1 // pred_fallthru
      _
    // Predicated region
    $region42: #{mnist_block_dag_forward.1} parent=1 // pred_check
      _
    $region43: #{mnist_block_dag_forward.1} parent=1 // pred_check_branch
      %618 = sbr.rel (0) target = $region45
    $region44: #{mnist_block_dag_forward.1} parent=1 // pred_region
      _
    $region45: #{mnist_block_dag_forward.1} parent=1 // pred_fallthru
      _
    %619 = vsyncpa [#allocation3], 1
    %620 = vsyncpa [#allocation6], 1
    %621 = vsyncpa [#allocation4], 1

</llo_original>
